<compile_context>
chip_gen: v5e
topology: v5e:2x2
jax: 0.10.0
libtpu: 0.0.40
codegen_flags: <defaults>
</compile_context>

<pallas_src>
import functools

import jax
import jax.numpy as jnp
from jax.experimental import pallas as pl
from jax.experimental.pallas import tpu as pltpu

LANE = 128          # lane width (last-dim tiling)
SUBLANE_BF16 = 16   # bf16 packs 16 rows per vreg sublane group
MAX_TB = 512        # max batch-tile rows (keeps VMEM use small on every gen)


def _round_up(x, m):
    return (x + m - 1) // m * m


def generator_kernel(x_ref, w1_ref, b1_ref, w2_ref, b2_ref, o_ref):
    """One batch tile: y = (x @ w1 + b1) @ w2 + b2  (bf16 matmul, f32 accum)."""
    x = x_ref[...]                                   # (TB, Fin)  bf16
    b1 = b1_ref[...]                                 # (1, Fout)  f32
    b2 = b2_ref[...]                                 # (1, Fout)  f32

    h = jnp.dot(x, w1_ref[...], preferred_element_type=jnp.float32) + b1
    h = h.astype(jnp.bfloat16)                       # feed MXU in bf16 again
    y = jnp.dot(h, w2_ref[...], preferred_element_type=jnp.float32) + b2
    # TODO(synk): no ReLU — `nn.ReLU(out)` in the reference builds a module and
    # does not transform the tensor.
    o_ref[...] = y.astype(o_ref.dtype)


@functools.partial(jax.jit, static_argnames=())
def generator_forward(x, w1t, b1, w2t, b2):
    """x: (B, in_dims) f32; w1t: (in, out); b1: (out,) or (1,out); w2t: (out, out)."""
    B, in_dims = x.shape
    out_dims = w1t.shape[1]

    # --- pad features to lane multiples, batch to a sublane-friendly tile ---
    fin = _round_up(in_dims, LANE)
    fout = _round_up(out_dims, LANE)
    tb = min(MAX_TB, _round_up(B, SUBLANE_BF16))
    b_pad = _round_up(B, tb)

    xp = jnp.zeros((b_pad, fin), jnp.bfloat16).at[:B, :in_dims].set(
        x.astype(jnp.bfloat16))
    w1p = jnp.zeros((fin, fout), jnp.bfloat16).at[:in_dims, :out_dims].set(
        w1t.astype(jnp.bfloat16))
    w2p = jnp.zeros((fout, fout), jnp.bfloat16).at[:out_dims, :out_dims].set(
        w2t.astype(jnp.bfloat16))
    b1p = jnp.zeros((1, fout), jnp.float32).at[:, :out_dims].set(
        b1.reshape(1, -1).astype(jnp.float32))
    b2p = jnp.zeros((1, fout), jnp.float32).at[:, :out_dims].set(
        b2.reshape(1, -1).astype(jnp.float32))

    grid = (b_pad // tb,)

    out_padded = pl.pallas_call(
        generator_kernel,
        out_shape=jax.ShapeDtypeStruct((b_pad, fout), jnp.float32),
        grid=grid,
        in_specs=[
            pl.BlockSpec((tb, fin), lambda i: (i, 0)),     # x tile per step
            pl.BlockSpec((fin, fout), lambda i: (0, 0)),   # w1 resident
            pl.BlockSpec((1, fout), lambda i: (0, 0)),     # b1 resident
            pl.BlockSpec((fout, fout), lambda i: (0, 0)),  # w2 resident
            pl.BlockSpec((1, fout), lambda i: (0, 0)),     # b2 resident
        ],
        out_specs=pl.BlockSpec((tb, fout), lambda i: (i, 0)),
        compiler_params=pltpu.CompilerParams(
            dimension_semantics=("parallel",),
            vmem_limit_bytes=48 * 1024 * 1024,
        ),
    )(xp, w1p, b1p, w2p, b2p)

    return out_padded[:B, :out_dims]


def init_params(key, in_dims, out_dims):
    # Deterministic init mimicking torch.nn.Linear's U(-1/sqrt(fan_in), 1/sqrt(fan_in)).
    k1, k2, k3, k4 = jax.random.split(key, 4)
    bound1 = 1.0 / jnp.sqrt(in_dims)
    bound2 = 1.0 / jnp.sqrt(out_dims)
    # weights stored pre-transposed: [in, out]
    w1t = jax.random.uniform(k1, (in_dims, out_dims), jnp.float32, -bound1, bound1)
    b1 = jax.random.uniform(k2, (1, out_dims), jnp.float32, -bound1, bound1)
    w2t = jax.random.uniform(k3, (out_dims, out_dims), jnp.float32, -bound2, bound2)
    b2 = jax.random.uniform(k4, (1, out_dims), jnp.float32, -bound2, bound2)
    return w1t, b1, w2t, b2


if __name__ == "__main__":
    key = jax.random.PRNGKey(0)
    B, in_dims, out_dims = 8, 32, 32

    kx, kp = jax.random.split(key)
    x = jax.random.normal(kx, (B, in_dims), jnp.float32)
    w1t, b1, w2t, b2 = init_params(kp, in_dims, out_dims)

    out = generator_forward(x, w1t, b1, w2t, b2)
    out = jax.block_until_ready(out)
    assert out.shape == (B, out_dims)

    # Reference in plain JAX using the same bf16-matmul / f32-accumulate recipe.
    h_ref = jnp.dot(x.astype(jnp.bfloat16), w1t.astype(jnp.bfloat16),
                    preferred_element_type=jnp.float32) + b1
    ref = jnp.dot(h_ref.astype(jnp.bfloat16), w2t.astype(jnp.bfloat16),
                  preferred_element_type=jnp.float32) + b2
    assert jnp.allclose(out, ref, atol=1e-3, rtol=1e-3), (
        float(jnp.max(jnp.abs(out - ref))))

    # Sanity vs the pure-f32 math (bf16 operand rounding only).
    ref_f32 = (x @ w1t + b1) @ w2t + b2
    assert jnp.allclose(out, ref_f32, atol=5e-2, rtol=5e-2)

    print("KERNEL_OK")
</pallas_src>

<mosaic_0001>
module attributes {stable_mosaic.version = 11 : i64} {
  func.func @generator_kernel(%arg0: i32, %arg1: memref<16x128xbf16, #tpu.memory_space<vmem>>, %arg2: memref<128x128xbf16, #tpu.memory_space<vmem>>, %arg3: memref<1x128xf32, #tpu.memory_space<vmem>>, %arg4: memref<128x128xbf16, #tpu.memory_space<vmem>>, %arg5: memref<1x128xf32, #tpu.memory_space<vmem>>, %arg6: memref<16x128xf32, #tpu.memory_space<vmem>>) attributes {dimension_semantics = [#tpu.dimension_semantics<parallel>], iteration_bounds = array<i64: 1>, scalar_prefetch = 0 : i64, scratch_operands = 0 : i64, tpu.core_type = #tpu.core_type<tc>, window_params = [{transform_indices = @transform_0, window_bounds = array<i64: 16, 128>}, {pipeline_mode = #tpu.pipeline_mode<synchronous>, transform_indices = @transform_1, window_bounds = array<i64: 128, 128>}, {pipeline_mode = #tpu.pipeline_mode<synchronous>, transform_indices = @transform_2, window_bounds = array<i64: 1, 128>}, {pipeline_mode = #tpu.pipeline_mode<synchronous>, transform_indices = @transform_3, window_bounds = array<i64: 128, 128>}, {pipeline_mode = #tpu.pipeline_mode<synchronous>, transform_indices = @transform_4, window_bounds = array<i64: 1, 128>}, {transform_indices = @transform_5, window_bounds = array<i64: 16, 128>}]} {
    %c0 = arith.constant 0 : index
    %c0_0 = arith.constant 0 : index
    %0 = vector.load %arg1[%c0, %c0_0] : memref<16x128xbf16, #tpu.memory_space<vmem>>, vector<16x128xbf16>
    %c0_1 = arith.constant 0 : index
    %c0_2 = arith.constant 0 : index
    %1 = vector.load %arg3[%c0_1, %c0_2] : memref<1x128xf32, #tpu.memory_space<vmem>>, vector<1x128xf32>
    %c0_3 = arith.constant 0 : index
    %c0_4 = arith.constant 0 : index
    %2 = vector.load %arg5[%c0_3, %c0_4] : memref<1x128xf32, #tpu.memory_space<vmem>>, vector<1x128xf32>
    %c0_5 = arith.constant 0 : index
    %c0_6 = arith.constant 0 : index
    %3 = vector.load %arg2[%c0_5, %c0_6] : memref<128x128xbf16, #tpu.memory_space<vmem>>, vector<128x128xbf16>
    %cst = arith.constant dense<0.000000e+00> : vector<16x128xf32>
    %4 = tpu.matmul %0, %3, %cst {dimension_numbers = #tpu.dot_dimension_numbers<[1], [0], [0], [1], [0, 0, 1, 1], [], []>} : vector<16x128xbf16>, vector<128x128xbf16>, vector<16x128xf32> -> vector<16x128xf32>
    %5 = vector.broadcast %1 : vector<1x128xf32> to vector<16x128xf32>
    %6 = arith.addf %4, %5 : vector<16x128xf32>
    %7 = arith.truncf %6 : vector<16x128xf32> to vector<16x128xbf16>
    %c0_7 = arith.constant 0 : index
    %c0_8 = arith.constant 0 : index
    %8 = vector.load %arg4[%c0_7, %c0_8] : memref<128x128xbf16, #tpu.memory_space<vmem>>, vector<128x128xbf16>
    %cst_9 = arith.constant dense<0.000000e+00> : vector<16x128xf32>
    %9 = tpu.matmul %7, %8, %cst_9 {dimension_numbers = #tpu.dot_dimension_numbers<[1], [0], [0], [1], [0, 0, 1, 1], [], []>} : vector<16x128xbf16>, vector<128x128xbf16>, vector<16x128xf32> -> vector<16x128xf32>
    %10 = vector.broadcast %2 : vector<1x128xf32> to vector<16x128xf32>
    %11 = arith.addf %9, %10 : vector<16x128xf32>
    %c0_10 = arith.constant 0 : index
    %c0_11 = arith.constant 0 : index
    %12 = vector.load %arg6[%c0_10, %c0_11] : memref<16x128xf32, #tpu.memory_space<vmem>>, vector<16x128xf32>
    tpu.vector_store %arg6[%c0_10, %c0_11], %11 {strides = array<i32>} : memref<16x128xf32, #tpu.memory_space<vmem>>, vector<16x128xf32>,
    return
  }
  func.func @transform_0(%arg0: i32) -> (i32, i32) {
    %c0_i32 = arith.constant 0 : i32
    %c0_i32_0 = arith.constant 0 : i32
    return %arg0, %c0_i32 : i32, i32
  }
  func.func @transform_1(%arg0: i32) -> (i32, i32) {
    %c0_i32 = arith.constant 0 : i32
    %c0_i32_0 = arith.constant 0 : i32
    %c0_i32_1 = arith.constant 0 : i32
    return %c0_i32, %c0_i32_0 : i32, i32
  }
  func.func @transform_2(%arg0: i32) -> (i32, i32) {
    %c0_i32 = arith.constant 0 : i32
    %c0_i32_0 = arith.constant 0 : i32
    %c0_i32_1 = arith.constant 0 : i32
    return %c0_i32, %c0_i32_0 : i32, i32
  }
  func.func @transform_3(%arg0: i32) -> (i32, i32) {
    %c0_i32 = arith.constant 0 : i32
    %c0_i32_0 = arith.constant 0 : i32
    %c0_i32_1 = arith.constant 0 : i32
    return %c0_i32, %c0_i32_0 : i32, i32
  }
  func.func @transform_4(%arg0: i32) -> (i32, i32) {
    %c0_i32 = arith.constant 0 : i32
    %c0_i32_0 = arith.constant 0 : i32
    %c0_i32_1 = arith.constant 0 : i32
    return %c0_i32, %c0_i32_0 : i32, i32
  }
  func.func @transform_5(%arg0: i32) -> (i32, i32) {
    %c0_i32 = arith.constant 0 : i32
    %c0_i32_0 = arith.constant 0 : i32
    return %arg0, %c0_i32 : i32, i32
  }
}

</mosaic_0001>

<llo_original>
// kernel: generator_forward.1
$region0: #{generator_forward.1}
  #allocation0 [shape = 'u32[]', space=smem, size = 0x4, offset = 0x4, fixed_abs, tag = 'smem constant byte address 0x4 - core index']
  #allocation1 [shape = 'u32[72,128]{1,0:T(1,128)}', space=vmem, size = 0x9000, scoped, tag = 'internal scratch']
  %s0 = inlined_call_operand.vmem [shape: bf16[16,128], index: 0, kind: input, shape index: {}]
  %s1 = inlined_call_operand.vmem [shape: bf16[128,128], index: 1, kind: input, shape index: {}]
  %s2 = inlined_call_operand.vmem [shape: f32[1,128], index: 2, kind: input, shape index: {}]
  %s3 = inlined_call_operand.vmem [shape: bf16[128,128], index: 3, kind: input, shape index: {}]
  %s4 = inlined_call_operand.vmem [shape: f32[1,128], index: 4, kind: input, shape index: {}]
  %s5 = inlined_call_operand.vmem [shape: f32[16,128], index: 5, kind: output, shape index: {}]
  %s6 = sld [smem:[#allocation0]]
  $region30: #{generator_forward.1} parent=0
    _
  %s8 = ssub.s32 1, %s6
  %s9 = scalar_select 0, %s8, %s6
  // Predicated region
  $region2: #{generator_forward.1} parent=0 // pred_check
    _
  $region3: #{generator_forward.1} parent=0 // pred_check_branch
    %11 = sbr.rel (0) target = $region5
  $region4: #{generator_forward.1} parent=0 // pred_region
    _
  $region5: #{generator_forward.1} parent=0 // pred_fallthru
    _
  // Predicated region
  $region6: #{generator_forward.1} parent=0 // pred_check
    _
  $region7: #{generator_forward.1} parent=0 // pred_check_branch
    %13 = sbr.rel (0) target = $region9
  $region8: #{generator_forward.1} parent=0 // pred_region
    _
  $region9: #{generator_forward.1} parent=0 // pred_fallthru
    _
  // Predicated region
  $region10: #{generator_forward.1} parent=0 // pred_check
    _
  $region11: #{generator_forward.1} parent=0 // pred_check_branch
    %15 = sbr.rel (0) target = $region13
  $region12: #{generator_forward.1} parent=0 // pred_region
    _
  $region13: #{generator_forward.1} parent=0 // pred_fallthru
    _
  // Predicated region
  $region14: #{generator_forward.1} parent=0 // pred_check
    _
  $region15: #{generator_forward.1} parent=0 // pred_check_branch
    %17 = sbr.rel (0) target = $region17
  $region16: #{generator_forward.1} parent=0 // pred_region
    _
  $region17: #{generator_forward.1} parent=0 // pred_fallthru
    _
  // Predicated region
  $region18: #{generator_forward.1} parent=0 // pred_check
    _
  $region19: #{generator_forward.1} parent=0 // pred_check_branch
    %19 = sbr.rel (0) target = $region21
  $region20: #{generator_forward.1} parent=0 // pred_region
    _
  $region21: #{generator_forward.1} parent=0 // pred_fallthru
    _
  %v20 = vld [vmem:[%s0] sm:$0xf]
  %v21 = vld [vmem:[%s0 + $0x4] sm:$0xf]
  %v22 = vld [vmem:[%s2] sm:$0x1]
  %v23 = vld [vmem:[%s4] sm:$0x1]
  %v24 = vld [vmem:[%s1] sm:$0xf]
  %v25 = vld [vmem:[%s1 + $0x4] sm:$0xf]
  %v26 = vld [vmem:[%s1 + $0x8] sm:$0xf]
  %v27 = vld [vmem:[%s1 + $0xc] sm:$0xf]
  %v28 = vld [vmem:[%s1 + $0x10] sm:$0xf]
  %v29 = vld [vmem:[%s1 + $0x14] sm:$0xf]
  %v30 = vld [vmem:[%s1 + $0x18] sm:$0xf]
  %v31 = vld [vmem:[%s1 + $0x1c] sm:$0xf]
  %v32 = vld [vmem:[%s1 + $0x20] sm:$0xf]
  %v33 = vld [vmem:[%s1 + $0x24] sm:$0xf]
  %v34 = vld [vmem:[%s1 + $0x28] sm:$0xf]
  %v35 = vld [vmem:[%s1 + $0x2c] sm:$0xf]
  %v36 = vld [vmem:[%s1 + $0x30] sm:$0xf]
  %v37 = vld [vmem:[%s1 + $0x34] sm:$0xf]
  %v38 = vld [vmem:[%s1 + $0x38] sm:$0xf]
  %v39 = vld [vmem:[%s1 + $0x3c] sm:$0xf]
  %v41 = vperm.slane %v22, 0
  %v45 = vunpack.c.l.b16 %v20
  %v46 = vunpack.c.l.b16 %v21
  %v47 = vpack.c.b16 %v46, %v45
  %v65 = vunpack.c.l.b16 %v24
  %v66 = vunpack.c.l.b16 %v25
  %v67 = vunpack.c.l.b16 %v26
  %v68 = vunpack.c.l.b16 %v27
  %v69 = vunpack.c.l.b16 %v28
  %v70 = vunpack.c.l.b16 %v29
  %v71 = vunpack.c.l.b16 %v30
  %v72 = vunpack.c.l.b16 %v31
  %v73 = vunpack.c.l.b16 %v32
  %v74 = vunpack.c.l.b16 %v33
  %v75 = vunpack.c.l.b16 %v34
  %v76 = vunpack.c.l.b16 %v35
  %v77 = vunpack.c.l.b16 %v36
  %v78 = vunpack.c.l.b16 %v37
  %v79 = vunpack.c.l.b16 %v38
  %v80 = vunpack.c.l.b16 %v39
  %v81 = vpack.c.b16 %v66, %v65
  %v82 = vpack.c.b16 %v68, %v67
  %v83 = vpack.c.b16 %v70, %v69
  %v84 = vpack.c.b16 %v72, %v71
  %v85 = vpack.c.b16 %v74, %v73
  %v86 = vpack.c.b16 %v76, %v75
  %v87 = vpack.c.b16 %v78, %v77
  %v88 = vpack.c.b16 %v80, %v79
  %97 = vmatpush.bf16.msra.mxu0 %v88
  %98 = vmatpush.bf16.msra.mxu0 %v87
  %99 = vmatpush.bf16.msra.mxu0 %v86
  %100 = vmatpush.bf16.msra.mxu0 %v85
  %101 = vmatpush.bf16.msra.mxu0 %v84
  %102 = vmatpush.bf16.msra.mxu0 %v83
  %103 = vmatpush.bf16.msra.mxu0 %v82
  %104 = vmatpush.bf16.msra.mxu0 %v81
  %105 = vmatmul.bf16.gmra.mxu0 %v47
  %v106 = vpop.f32.mrf.mxu0
  %v107 = vadd.f32 %v41, %v106
  %v108 = vpop.f32.mrf.mxu0
  %v109 = vadd.f32 %v41, %v108
  %110 = vdwg.mxu0
  %v111 = vpack.c.bf16 %v109, %v107
  %v112 = vld [vmem:[%s3] sm:$0xf]
  %v113 = vld [vmem:[%s3 + $0x4] sm:$0xf]
  %v114 = vld [vmem:[%s3 + $0x8] sm:$0xf]
  %v115 = vld [vmem:[%s3 + $0xc] sm:$0xf]
  %v116 = vld [vmem:[%s3 + $0x10] sm:$0xf]
  %v117 = vld [vmem:[%s3 + $0x14] sm:$0xf]
  %v118 = vld [vmem:[%s3 + $0x18] sm:$0xf]
  %v119 = vld [vmem:[%s3 + $0x1c] sm:$0xf]
  %v120 = vld [vmem:[%s3 + $0x20] sm:$0xf]
  %v121 = vld [vmem:[%s3 + $0x24] sm:$0xf]
  %v122 = vld [vmem:[%s3 + $0x28] sm:$0xf]
  %v123 = vld [vmem:[%s3 + $0x2c] sm:$0xf]
  %v124 = vld [vmem:[%s3 + $0x30] sm:$0xf]
  %v125 = vld [vmem:[%s3 + $0x34] sm:$0xf]
  %v126 = vld [vmem:[%s3 + $0x38] sm:$0xf]
  %v127 = vld [vmem:[%s3 + $0x3c] sm:$0xf]
  %v129 = vperm.slane %v23, 0
  %v147 = vunpack.c.l.b16 %v112
  %v148 = vunpack.c.l.b16 %v113
  %v149 = vunpack.c.l.b16 %v114
  %v150 = vunpack.c.l.b16 %v115
  %v151 = vunpack.c.l.b16 %v116
  %v152 = vunpack.c.l.b16 %v117
  %v153 = vunpack.c.l.b16 %v118
  %v154 = vunpack.c.l.b16 %v119
  %v155 = vunpack.c.l.b16 %v120
  %v156 = vunpack.c.l.b16 %v121
  %v157 = vunpack.c.l.b16 %v122
  %v158 = vunpack.c.l.b16 %v123
  %v159 = vunpack.c.l.b16 %v124
  %v160 = vunpack.c.l.b16 %v125
  %v161 = vunpack.c.l.b16 %v126
  %v162 = vunpack.c.l.b16 %v127
  %v163 = vpack.c.b16 %v148, %v147
  %v164 = vpack.c.b16 %v150, %v149
  %v165 = vpack.c.b16 %v152, %v151
  %v166 = vpack.c.b16 %v154, %v153
  %v167 = vpack.c.b16 %v156, %v155
  %v168 = vpack.c.b16 %v158, %v157
  %v169 = vpack.c.b16 %v160, %v159
  %v170 = vpack.c.b16 %v162, %v161
  %179 = vmatpush.bf16.msra.mxu0 %v170
  %180 = vmatpush.bf16.msra.mxu0 %v169
  %181 = vmatpush.bf16.msra.mxu0 %v168
  %182 = vmatpush.bf16.msra.mxu0 %v167
  %183 = vmatpush.bf16.msra.mxu0 %v166
  %184 = vmatpush.bf16.msra.mxu0 %v165
  %185 = vmatpush.bf16.msra.mxu0 %v164
  %186 = vmatpush.bf16.msra.mxu0 %v163
  %187 = vmatmul.bf16.gmra.mxu0 %v111
  %v188 = vpop.f32.mrf.mxu0
  %v189 = vadd.f32 %v129, %v188
  %v190 = vpop.f32.mrf.mxu0
  %v191 = vadd.f32 %v129, %v190
  %192 = vdwg.mxu0
  %193 = vst [vmem:[%s5] sm:$0xff] %v189
  %194 = vst [vmem:[%s5 + $0x8] sm:$0xff] %v191
  // Predicated region
  $region22: #{generator_forward.1} parent=0 // pred_check
    _
  $region23: #{generator_forward.1} parent=0 // pred_check_branch
    %196 = sbr.rel (0) target = $region25
  $region24: #{generator_forward.1} parent=0 // pred_region
    _
  $region25: #{generator_forward.1} parent=0 // pred_fallthru
    _
  // Predicated region
  $region26: #{generator_forward.1} parent=0 // pred_check
    _
  $region27: #{generator_forward.1} parent=0 // pred_check_branch
    %198 = sbr.rel (0) target = $region29
  $region28: #{generator_forward.1} parent=0 // pred_region
    _
  $region29: #{generator_forward.1} parent=0 // pred_fallthru
    _

</llo_original>
